<compile_context>
chip_gen: v5e
topology: v5e:2x2
jax: 0.10.0
libtpu: 0.0.40
codegen_flags: <defaults>
</compile_context>

<pallas_src>
import jax
import jax.numpy as jnp
from jax.experimental import pallas as pl
from jax.experimental.pallas import tpu as pltpu


def _inverse_norm_kernel(x_ref, std_ref, mean_ref, o_ref):
    # x_ref:    (TILE_R, TILE_L)  activation tile
    # std_ref:  (TILE_R, 1)       f32, per-row scale (broadcast across lanes)
    # mean_ref: (TILE_R, 1)       f32, per-row shift (broadcast across lanes)
    x = x_ref[...].astype(jnp.float32)
    o_ref[...] = (x * std_ref[...] + mean_ref[...]).astype(o_ref.dtype)


def _round_up(a, b):
    return ((a + b - 1) // b) * b


def inverse_normalize(x, x_mean, x_std, *,
                      max_lane_tile=2048,
                      target_block_bytes=4 << 20):
    """x: (N, C, H, W); x_mean, x_std: per-channel params (any shape of size C).

    Returns (N, C, H, W), same dtype as x.  Semantics match
    x * x_std.reshape(1, C, 1, 1) + x_mean.reshape(1, C, 1, 1)
    (the canonical use of the module with per-channel statistics).
    """
    N, C, H, W = x.shape
    R, L = N * C, H * W
    out_dtype = x.dtype

    # Free reshape of the contiguous NCHW buffer (no data movement).
    x2 = x.reshape(R, L)

    # Per-row (channel-indexed) params, kept in f32 for precision.  Accept
    # (C,), (C,1,1), (1,C,1,1), ... — anything with C elements.
    mean_c = x_mean.astype(jnp.float32).reshape(-1)
    std_c = x_std.astype(jnp.float32).reshape(-1)
    mean_rows = jnp.tile(mean_c, N).reshape(R, 1)   # tiny: N*C f32 values
    std_rows = jnp.tile(std_c, N).reshape(R, 1)

    # --- lane tile: full extent if small, else a large multiple of 128 ---
    tile_l = L if L <= max_lane_tile else max_lane_tile

    # --- row tile: target ~target_block_bytes per block, multiple of 8 ---
    itemsize = jnp.dtype(out_dtype).itemsize
    rows_budget = max(8, target_block_bytes // max(1, tile_l * itemsize))
    tile_r = min(_round_up(R, 8), _round_up(rows_budget, 8))

    # Ragged edges handled by Pallas (padded reads / masked edge writes):
    grid = (pl.cdiv(R, tile_r), pl.cdiv(L, tile_l))

    out2 = pl.pallas_call(
        _inverse_norm_kernel,
        out_shape=jax.ShapeDtypeStruct((R, L), out_dtype),
        grid=grid,
        in_specs=[
            pl.BlockSpec((tile_r, tile_l), lambda i, j: (i, j)),  # x tile
            pl.BlockSpec((tile_r, 1), lambda i, j: (i, 0)),       # std column
            pl.BlockSpec((tile_r, 1), lambda i, j: (i, 0)),       # mean column
        ],
        out_specs=pl.BlockSpec((tile_r, tile_l), lambda i, j: (i, j)),
        compiler_params=pltpu.CompilerParams(
            # Both axes independent -> shard grid across TCs on megacore parts.
            dimension_semantics=("parallel", "parallel"),
            # ~4 MiB blocks, double-buffered in + out ≈ 16 MiB: exceeds the
            # v5e 16 MiB scoped default, so raise it explicitly (still far
            # below 64 MiB physical VMEM on v7x / 128 MiB on v5e/v6e).
            vmem_limit_bytes=40 << 20,
        ),
    )(x2, std_rows, mean_rows)

    return out2.reshape(N, C, H, W)


if __name__ == "__main__":
    key = jax.random.PRNGKey(0)

    # Small shapes consistent with the module's forward (NCHW, per-channel params).
    N, C, H, W = 2, 4, 16, 16
    x = jax.random.normal(key, (N, C, H, W), dtype=jnp.float32)

    # Deterministic per-channel "parameters" (same role as the nn.Parameter buffers).
    x_mean = jnp.arange(C, dtype=jnp.float32) * 0.5          # [0.0, 0.5, 1.0, 1.5]
    x_std = 1.0 + 0.25 * jnp.arange(C, dtype=jnp.float32)    # [1.0, 1.25, 1.5, 1.75]

    y = inverse_normalize(x, x_mean, x_std)
    y = jax.block_until_ready(y)

    # Reference: per-channel broadcasted FMA (same as the PyTorch module).
    y_ref = x * x_std.reshape(1, C, 1, 1) + x_mean.reshape(1, C, 1, 1)
    assert y.shape == x.shape and y.dtype == x.dtype
    assert jnp.allclose(y, y_ref, atol=1e-6, rtol=1e-6)

    print("KERNEL_OK")
</pallas_src>

<mosaic_0001>
module attributes {stable_mosaic.version = 11 : i64} {
  func.func @_inverse_norm_kernel(%arg0: i32, %arg1: i32, %arg2: memref<8x256xf32, #tpu.memory_space<vmem>>, %arg3: memref<8x1xf32, #tpu.memory_space<vmem>>, %arg4: memref<8x1xf32, #tpu.memory_space<vmem>>, %arg5: memref<8x256xf32, #tpu.memory_space<vmem>>) attributes {dimension_semantics = [#tpu.dimension_semantics<parallel>, #tpu.dimension_semantics<parallel>], iteration_bounds = array<i64: 1, 1>, scalar_prefetch = 0 : i64, scratch_operands = 0 : i64, tpu.core_type = #tpu.core_type<tc>, window_params = [{transform_indices = @transform_0, window_bounds = array<i64: 8, 256>}, {transform_indices = @transform_1, window_bounds = array<i64: 8, 1>}, {transform_indices = @transform_2, window_bounds = array<i64: 8, 1>}, {transform_indices = @transform_3, window_bounds = array<i64: 8, 256>}]} {
    %c0 = arith.constant 0 : index
    %c0_0 = arith.constant 0 : index
    %0 = vector.load %arg2[%c0, %c0_0] : memref<8x256xf32, #tpu.memory_space<vmem>>, vector<8x256xf32>
    %c0_1 = arith.constant 0 : index
    %c0_2 = arith.constant 0 : index
    %1 = vector.load %arg3[%c0_1, %c0_2] : memref<8x1xf32, #tpu.memory_space<vmem>>, vector<8x1xf32>
    %2 = vector.broadcast %1 : vector<8x1xf32> to vector<8x256xf32>
    %3 = arith.mulf %0, %2 : vector<8x256xf32>
    %c0_3 = arith.constant 0 : index
    %c0_4 = arith.constant 0 : index
    %4 = vector.load %arg4[%c0_3, %c0_4] : memref<8x1xf32, #tpu.memory_space<vmem>>, vector<8x1xf32>
    %5 = vector.broadcast %4 : vector<8x1xf32> to vector<8x256xf32>
    %6 = arith.addf %3, %5 : vector<8x256xf32>
    %c0_5 = arith.constant 0 : index
    %c0_6 = arith.constant 0 : index
    %7 = vector.load %arg5[%c0_5, %c0_6] : memref<8x256xf32, #tpu.memory_space<vmem>>, vector<8x256xf32>
    tpu.vector_store %arg5[%c0_5, %c0_6], %6 {strides = array<i32>} : memref<8x256xf32, #tpu.memory_space<vmem>>, vector<8x256xf32>,
    return
  }
  func.func @transform_0(%arg0: i32, %arg1: i32) -> (i32, i32) {
    %c0_i32 = arith.constant 0 : i32
    return %arg0, %arg1 : i32, i32
  }
  func.func @transform_1(%arg0: i32, %arg1: i32) -> (i32, i32) {
    %c0_i32 = arith.constant 0 : i32
    %c0_i32_0 = arith.constant 0 : i32
    return %arg0, %c0_i32 : i32, i32
  }
  func.func @transform_2(%arg0: i32, %arg1: i32) -> (i32, i32) {
    %c0_i32 = arith.constant 0 : i32
    %c0_i32_0 = arith.constant 0 : i32
    return %arg0, %c0_i32 : i32, i32
  }
  func.func @transform_3(%arg0: i32, %arg1: i32) -> (i32, i32) {
    %c0_i32 = arith.constant 0 : i32
    return %arg0, %arg1 : i32, i32
  }
}

</mosaic_0001>

<llo_original>
// kernel: tpu_custom_call.1
$region0: #{tpu_custom_call.1}
  #allocation0 [shape = 'u32[]', space=smem, size = 0x4, offset = 0x4, fixed_abs, tag = 'smem constant byte address 0x4 - core index']
  #allocation1 [shape = 'u32[72,128]{1,0:T(1,128)}', space=vmem, size = 0x9000, scoped, tag = 'internal scratch']
  %s0 = inlined_call_operand.vmem [shape: f32[8,256], index: 0, kind: input, shape index: {}]
  %s1 = inlined_call_operand.vmem [shape: f32[8,1], index: 1, kind: input, shape index: {}]
  %s2 = inlined_call_operand.vmem [shape: f32[8,1], index: 2, kind: input, shape index: {}]
  %s3 = inlined_call_operand.hbm [shape: f32[8,256], index: 3, kind: output, shape index: {}]
  %s4 = sld [smem:[#allocation0]]
  $region22: #{tpu_custom_call.1} parent=0
    _
  %s6 = ssub.s32 1, %s4
  %s7 = scalar_select 0, %s6, %s4
  $region1: #{tpu_custom_call.1} parent=0
    #allocation2 [shape = 'u8[8192]{0}', space=vmem, size = 0x2000, scoped, tag = 'output window, operand 0, single buffered']
    #allocation3 [shape = 's32[1]{0}', space=sflag, size = 0x4, scoped, tag = 'scoped memory for tpu_custom_call.1']
    %8 = vsyncpa [#allocation3], 0
    // Predicated region
    $region2: #{tpu_custom_call.1} parent=1 // pred_check
      _
    $region3: #{tpu_custom_call.1} parent=1 // pred_check_branch
      %10 = sbr.rel (0) target = $region5
    $region4: #{tpu_custom_call.1} parent=1 // pred_region
      _
    $region5: #{tpu_custom_call.1} parent=1 // pred_fallthru
      _
    // Predicated region
    $region6: #{tpu_custom_call.1} parent=1 // pred_check
      _
    $region7: #{tpu_custom_call.1} parent=1 // pred_check_branch
      %12 = sbr.rel (0) target = $region9
    $region8: #{tpu_custom_call.1} parent=1 // pred_region
      _
    $region9: #{tpu_custom_call.1} parent=1 // pred_fallthru
      _
    // Predicated region
    $region10: #{tpu_custom_call.1} parent=1 // pred_check
      _
    $region11: #{tpu_custom_call.1} parent=1 // pred_check_branch
      %14 = sbr.rel (0) target = $region13
    $region12: #{tpu_custom_call.1} parent=1 // pred_region
      _
    $region13: #{tpu_custom_call.1} parent=1 // pred_fallthru
      _
    %v15 = vld [vmem:[%s0] sm:$0xff]
    %v16 = vld [vmem:[%s0 + $0x8] sm:$0xff]
    %v17 = vld [vmem:[%s1] sm:$0xff]
    %19 = vset.pattern.permute.xlu0 0
    %20 = vperm.xlu0 %19, %v17
    %v21 = vpop.permute.xlu0 %20
    %v23 = vmul.f32 %v15, %v21
    %v24 = vmul.f32 %v16, %v21
    %v25 = vld [vmem:[%s2] sm:$0xff]
    %27 = vset.pattern.permute.xlu0 0
    %28 = vperm.xlu0 %27, %v25
    %v29 = vpop.permute.xlu0 %28
    %v31 = vadd.f32 %v23, %v29
    %v32 = vadd.f32 %v24, %v29
    %33 = vst [vmem:[#allocation2] sm:$0xff] %v31
    %34 = vst [vmem:[#allocation2 + $0x8] sm:$0xff] %v32
    // Predicated region
    $region14: #{tpu_custom_call.1} parent=1 // pred_check
      _
    $region15: #{tpu_custom_call.1} parent=1 // pred_check_branch
      %36 = sbr.rel (0) target = $region17
    $region16: #{tpu_custom_call.1} parent=1 // pred_region
      %38 = vsyncadd [#allocation3], 0
      %s40 = sshll.u32 [#allocation2], 4
      %s41 = int_to_ptr.vmem [resolvable:$true] %s40
      %s42 = sshll.u32 %s3, 4
      %s43 = int_to_ptr.hbm [resolvable:$true] %s42
      %45 = dma.vmem_to_hbm [thread:$0]  %s41, 256, %s43, [#allocation3]
    $region17: #{tpu_custom_call.1} parent=1 // pred_fallthru
      _
    // Predicated region
    $region18: #{tpu_custom_call.1} parent=1 // pred_check
      _
    $region19: #{tpu_custom_call.1} parent=1 // pred_check_branch
      %47 = sbr.rel (0) target = $region21
    $region20: #{tpu_custom_call.1} parent=1 // pred_region
      %49 = dma.done [#allocation3], 256
    $region21: #{tpu_custom_call.1} parent=1 // pred_fallthru
      _
    %50 = vsyncpa [#allocation3], 1

</llo_original>
